<compile_context>
chip_gen: v7x
topology: tpu7x:2x2x1
jax: 0.10.0
libtpu: 0.0.40
codegen_flags: <defaults>
</compile_context>

<pallas_src>
import math
import functools

import jax
import jax.numpy as jnp
from jax.experimental import pallas as pl
from jax.experimental.pallas import tpu as pltpu


def _js_loss_kernel(pred_ref, labels_ref, out_ref, acc_ref, *, w0, w1, scale,
                    valid_n, block_n):
    p_idx = pl.program_id(0)            # megacore-parallel batch split (v7x only)
    i = pl.program_id(1)                # serial batch-reduction axis
    n_inner = pl.num_programs(1)

    @pl.when(i == 0)
    def _():
        acc_ref[...] = jnp.zeros_like(acc_ref)

    logits = pred_ref[...].astype(jnp.float32)          # (TN, C)
    labels = labels_ref[...]                            # (TN, 1) int32
    tn, c = logits.shape

    # --- full-tile work: stable-softmax denominator + label-column gather ---
    m = jnp.max(logits, axis=1, keepdims=True)          # (TN, 1)  XLU
    shifted = logits - m                                 # (TN, C)  VPU
    e = jnp.exp(shifted)                                 # (TN, C)  EUP (only full-tile transcendental)
    sum_e = jnp.sum(e, axis=1, keepdims=True)            # (TN, 1)  XLU

    iota_c = jax.lax.broadcasted_iota(jnp.int32, (tn, c), 1)
    is_label = iota_c == labels                           # (TN, C)  VPU
    # gather shifted logit of the label column via masked row-max (XLU)
    shifted_label = jnp.max(jnp.where(is_label, shifted, -jnp.inf),
                            axis=1, keepdims=True)        # (TN, 1)

    # --- per-row scalar math (cheap: (TN, 1) vectors) ---
    p_label = jnp.exp(shifted_label) / sum_e              # exact softmax prob of label
    log_sum = jnp.log(sum_e)
    lp_label = shifted_label - log_sum                     # log p_label (analytic)
    mean_l = w0 + w1 * p_label                             # mean at the label column (<= 1)
    log_mean_l = jnp.log(mean_l)                           # clamp(1e-7,1) is a no-op: mean_l >= w0

    neg_log_w1 = -math.log(w1)
    # per-row JS value:
    #   w0 * KL(onehot||mean)_row = -w0 * log_mean_l
    #   w1 * KL(p||mean)_row     =  w1 * [ -log(w1)*(1 - p_label)
    #                                      + p_label*(lp_label - log_mean_l) ]
    row_val = (-w0) * log_mean_l + w1 * (
        neg_log_w1 * (1.0 - p_label) + p_label * (lp_label - log_mean_l))

    # Mask batch-padding rows (per-row vector only -> negligible cost).
    row = ((p_idx * n_inner + i) * block_n
           + jax.lax.broadcasted_iota(jnp.int32, (tn, 1), 0))
    row_val = jnp.where(row < valid_n, row_val, 0.0)

    acc_ref[...] += row_val                                # (block_n, 1) VPU add

    @pl.when(i == n_inner - 1)
    def _():
        # Collapse once per shard: mean over batch + JS normalization scale.
        total = (scale / valid_n) * jnp.sum(acc_ref[...])
        out_ref[...] = jnp.broadcast_to(total, out_ref.shape).astype(jnp.float32)


def _tpu_device_kind():
    try:
        return jax.devices()[0].device_kind.lower()
    except Exception:
        return ""


def js_loss(pred, labels, *, num_classes, weights_1, block_n=None):
    """JAX/Pallas equivalent of JSLoss(num_classes, weights_1)(pred, labels)."""
    n, c = pred.shape
    assert c == num_classes
    w0 = float(weights_1)
    w1 = 1.0 - w0
    assert 0.0 < w0 < 1.0, "weights_1 must lie strictly in (0, 1)"
    assert abs(1.0 - (w0 + w1)) < 1e-3
    scale = -1.0 / ((1.0 - w0) * math.log(1.0 - w0))

    kind = _tpu_device_kind()
    is_v7 = "v7" in kind
    # Generation-aware VMEM budget (a limit, not a reservation).
    vmem_cap = (48 << 20) if is_v7 else (100 << 20)

    # Real per-row VMEM footprint:
    #   2 double-buffered logits tiles (input dtype) + ~4 f32 (block_n, C)
    #   temporaries + 2 lane-padded (x128) int32 label tiles + lane-padded
    #   (block_n, 1) f32 accumulator.
    in_bytes = jnp.dtype(pred.dtype).itemsize
    bytes_per_row = 2 * c * in_bytes + 4 * c * 4 + 2 * 128 * 4 + 128 * 4

    block_cap = 512 if is_v7 else 1024
    if block_n is None:
        block_n = block_cap
    vmem_rows = max(8, (int(0.75 * vmem_cap) // bytes_per_row) // 8 * 8)
    block_n = min(int(block_n), vmem_rows)

    # Megacore split only where it helps: 2 TensorCores (v7x) and a batch big
    # enough that the split doesn't just add padding.
    n_parallel = 2 if (is_v7 and n >= 64) else 1
    if n_parallel > 1:
        # Keep >= 2 pipelined steps per core when possible.
        per_core = pl.cdiv(n, n_parallel)
        block_n = min(block_n, max(8, ((pl.cdiv(per_core, 2)) + 7) // 8 * 8))

    # Never allocate a tile larger than the (padded) per-shard batch.
    per_shard_rows = pl.cdiv(n, n_parallel)
    block_n = max(8, min(block_n, ((per_shard_rows + 7) // 8) * 8))

    n_inner = pl.cdiv(n, n_parallel * block_n)
    n_pad = n_parallel * n_inner * block_n

    pred_p = pred if n_pad == n else jnp.pad(pred, ((0, n_pad - n), (0, 0)))
    labels2d = labels.astype(jnp.int32).reshape(n, 1)
    labels_p = labels2d if n_pad == n else jnp.pad(labels2d, ((0, n_pad - n), (0, 0)))

    kernel = functools.partial(_js_loss_kernel, w0=w0, w1=w1, scale=scale,
                               valid_n=int(n), block_n=block_n)

    def batch_map(p, i):
        return (p * n_inner + i, 0)

    footprint = bytes_per_row * block_n + (1 << 20)       # + small fixed slack
    vmem_limit = int(min(vmem_cap, max(32 << 20, footprint)))

    out = pl.pallas_call(
        kernel,
        out_shape=jax.ShapeDtypeStruct((n_parallel * 8, 128), jnp.float32),
        grid_spec=pltpu.PrefetchScalarGridSpec(
            num_scalar_prefetch=0,
            grid=(n_parallel, n_inner),
            in_specs=[
                pl.BlockSpec((block_n, c), batch_map),   # logits tile
                pl.BlockSpec((block_n, 1), batch_map),   # labels tile (rides along)
            ],
            # lane-dense (8,128) per-shard output block, broadcast-filled with
            # the shard's already-scaled partial sum
            out_specs=pl.BlockSpec((8, 128), lambda p, i: (p, 0)),
            scratch_shapes=[pltpu.VMEM((block_n, 1), jnp.float32)],  # per-row accumulator
        ),
        compiler_params=pltpu.CompilerParams(
            dimension_semantics=("parallel", "arbitrary"),
            vmem_limit_bytes=vmem_limit,
        ),
    )(pred_p, labels_p)

    # each parallel shard wrote its already-scaled partial; sum the shards
    return out.reshape(n_parallel, 8, 128)[:, 0, 0].sum()


def _js_loss_reference(pred, labels, *, num_classes, weights_1):
    # Pure-JAX port of the PyTorch forward for verification.
    w0 = float(weights_1)
    w1 = 1.0 - w0
    scale = -1.0 / ((1.0 - w0) * math.log(1.0 - w0))
    p = jax.nn.softmax(pred, axis=1)
    oh = jax.nn.one_hot(labels, num_classes, dtype=jnp.float32)
    mean = w0 * oh + w1 * p
    mean_log = jnp.log(jnp.clip(mean, 1e-7, 1.0))

    def kl(target):
        v = target * (jnp.log(jnp.maximum(target, 1e-7)) - mean_log)
        v = jnp.where(target > 0, v, 0.0)
        return jnp.mean(jnp.sum(v, axis=1))

    return scale * (w0 * kl(oh) + w1 * kl(p))


if __name__ == "__main__":
    # JSLoss has no learnable parameters; only hyperparameters (num_classes, weights_1).
    # NOTE: the PyTorch forward's list-of-preds branch only type-checks for a
    # single element (len(weights)==2), which is equivalent to the tensor path.
    N, C = 16, 128
    WEIGHTS_1 = 0.7

    key = jax.random.PRNGKey(0)
    k_pred, k_lab = jax.random.split(key)
    pred = jax.random.normal(k_pred, (N, C), dtype=jnp.float32)
    labels = jax.random.randint(k_lab, (N,), 0, C, dtype=jnp.int32)

    out = js_loss(pred, labels, num_classes=C, weights_1=WEIGHTS_1)
    out = jax.block_until_ready(out)
    ref = _js_loss_reference(pred, labels, num_classes=C, weights_1=WEIGHTS_1)
    assert jnp.allclose(out, ref, rtol=1e-5, atol=1e-5), (out, ref)

    # Ragged batch exercises the padding + row-mask path.
    N2 = 13
    k2p, k2l = jax.random.split(jax.random.PRNGKey(1))
    pred2 = jax.random.normal(k2p, (N2, C), dtype=jnp.float32)
    labels2 = jax.random.randint(k2l, (N2,), 0, C, dtype=jnp.int32)
    out2 = jax.block_until_ready(
        js_loss(pred2, labels2, num_classes=C, weights_1=WEIGHTS_1))
    ref2 = _js_loss_reference(pred2, labels2, num_classes=C, weights_1=WEIGHTS_1)
    assert jnp.allclose(out2, ref2, rtol=1e-5, atol=1e-5), (out2, ref2)

    print("KERNEL_OK")
</pallas_src>

<mosaic_0001>
module attributes {stable_mosaic.version = 11 : i64} {
  func.func @_js_loss_kernel(%arg0: i32, %arg1: i32, %arg2: memref<16x128xf32, #tpu.memory_space<vmem>>, %arg3: memref<16x1xi32, #tpu.memory_space<vmem>>, %arg4: memref<8x128xf32, #tpu.memory_space<vmem>>, %arg5: memref<16x1xf32, #tpu.memory_space<vmem>>) attributes {dimension_semantics = [#tpu.dimension_semantics<parallel>, #tpu.dimension_semantics<arbitrary>], iteration_bounds = array<i64: 1, 1>, scalar_prefetch = 0 : i64, scratch_operands = 1 : i64, tpu.core_type = #tpu.core_type<tc>, window_params = [{transform_indices = @transform_0, window_bounds = array<i64: 16, 128>}, {transform_indices = @transform_1, window_bounds = array<i64: 16, 1>}, {transform_indices = @transform_2, window_bounds = array<i64: 8, 128>}]} {
    %c0_i32 = arith.constant 0 : i32
    %0 = arith.cmpi eq, %arg1, %c0_i32 : i32
    %1 = arith.extui %0 : i1 to i32
    %c0_i32_0 = arith.constant 0 : i32
    %2 = arith.cmpi ne, %1, %c0_i32_0 : i32
    scf.if %2 {
      %cst_21 = arith.constant 0.000000e+00 : f32
      %56 = vector.broadcast %cst_21 : f32 to vector<16x1xf32>
      %c0_22 = arith.constant 0 : index
      %c0_23 = arith.constant 0 : index
      %57 = vector.load %arg5[%c0_22, %c0_23] : memref<16x1xf32, #tpu.memory_space<vmem>>, vector<16x1xf32>
      tpu.vector_store %arg5[%c0_22, %c0_23], %56 {strides = array<i32>} : memref<16x1xf32, #tpu.memory_space<vmem>>, vector<16x1xf32>,
    } else {
    }
    %c0 = arith.constant 0 : index
    %c0_1 = arith.constant 0 : index
    %3 = vector.load %arg2[%c0, %c0_1] : memref<16x128xf32, #tpu.memory_space<vmem>>, vector<16x128xf32>
    %c0_2 = arith.constant 0 : index
    %c0_3 = arith.constant 0 : index
    %4 = vector.load %arg3[%c0_2, %c0_3] : memref<16x1xi32, #tpu.memory_space<vmem>>, vector<16x1xi32>
    %cst = arith.constant dense<0xFF800000> : vector<16xf32>
    %5 = vector.multi_reduction <maximumf>, %3, %cst [1] : vector<16x128xf32> to vector<16xf32>
    %6 = vector.shape_cast %5 : vector<16xf32> to vector<16x1xf32>
    %7 = vector.broadcast %6 : vector<16x1xf32> to vector<16x128xf32>
    %8 = arith.subf %3, %7 : vector<16x128xf32>
    %9 = math.exp %8 : vector<16x128xf32>
    %cst_4 = arith.constant dense<0.000000e+00> : vector<16xf32>
    %10 = vector.multi_reduction <add>, %9, %cst_4 [1] : vector<16x128xf32> to vector<16xf32>
    %11 = vector.shape_cast %10 : vector<16xf32> to vector<16x1xf32>
    %12 = tpu.iota {dimensions = array<i32: 1>} : vector<16x128xi32>
    %13 = vector.broadcast %4 : vector<16x1xi32> to vector<16x128xi32>
    %14 = arith.cmpi eq, %12, %13 : vector<16x128xi32>
    %cst_5 = arith.constant 0xFF800000 : f32
    %15 = vector.broadcast %cst_5 : f32 to vector<16x128xf32>
    %16 = arith.select %14, %8, %15 : vector<16x128xi1>, vector<16x128xf32>
    %cst_6 = arith.constant dense<0xFF800000> : vector<16xf32>
    %17 = vector.multi_reduction <maximumf>, %16, %cst_6 [1] : vector<16x128xf32> to vector<16xf32>
    %18 = vector.shape_cast %17 : vector<16xf32> to vector<16x1xf32>
    %19 = math.exp %18 : vector<16x1xf32>
    %20 = arith.divf %19, %11 : vector<16x1xf32>
    %21 = math.log %11 : vector<16x1xf32>
    %22 = arith.subf %18, %21 : vector<16x1xf32>
    %cst_7 = arith.constant 3.000000e-01 : f32
    %23 = vector.broadcast %cst_7 : f32 to vector<16x1xf32>
    %24 = arith.mulf %23, %20 : vector<16x1xf32>
    %cst_8 = arith.constant 0.699999988 : f32
    %25 = vector.broadcast %cst_8 : f32 to vector<16x1xf32>
    %26 = arith.addf %25, %24 : vector<16x1xf32>
    %27 = math.log %26 : vector<16x1xf32>
    %cst_9 = arith.constant -0.699999988 : f32
    %28 = vector.broadcast %cst_9 : f32 to vector<16x1xf32>
    %29 = arith.mulf %28, %27 : vector<16x1xf32>
    %cst_10 = arith.constant 1.000000e+00 : f32
    %30 = vector.broadcast %cst_10 : f32 to vector<16x1xf32>
    %31 = arith.subf %30, %20 : vector<16x1xf32>
    %cst_11 = arith.constant 1.20397282 : f32
    %32 = vector.broadcast %cst_11 : f32 to vector<16x1xf32>
    %33 = arith.mulf %32, %31 : vector<16x1xf32>
    %34 = arith.subf %22, %27 : vector<16x1xf32>
    %35 = arith.mulf %20, %34 : vector<16x1xf32>
    %36 = arith.addf %33, %35 : vector<16x1xf32>
    %cst_12 = arith.constant 3.000000e-01 : f32
    %37 = vector.broadcast %cst_12 : f32 to vector<16x1xf32>
    %38 = arith.mulf %37, %36 : vector<16x1xf32>
    %39 = arith.addf %29, %38 : vector<16x1xf32>
    %c1_i32 = arith.constant 1 : i32
    %40 = arith.muli %arg0, %c1_i32 : i32
    %41 = arith.addi %40, %arg1 : i32
    %c16_i32 = arith.constant 16 : i32
    %42 = arith.muli %41, %c16_i32 : i32
    %43 = tpu.iota {dimensions = array<i32: 0>} : vector<16x1xi32>
    %44 = vector.broadcast %42 : i32 to vector<16x1xi32>
    %45 = arith.addi %44, %43 : vector<16x1xi32>
    %c16_i32_13 = arith.constant 16 : i32
    %46 = vector.broadcast %c16_i32_13 : i32 to vector<16x1xi32>
    %47 = arith.cmpi slt, %45, %46 : vector<16x1xi32>
    %cst_14 = arith.constant 0.000000e+00 : f32
    %48 = vector.broadcast %cst_14 : f32 to vector<16x1xf32>
    %49 = arith.select %47, %39, %48 : vector<16x1xi1>, vector<16x1xf32>
    %c0_15 = arith.constant 0 : index
    %c0_16 = arith.constant 0 : index
    %50 = vector.load %arg5[%c0_15, %c0_16] : memref<16x1xf32, #tpu.memory_space<vmem>>, vector<16x1xf32>
    %51 = arith.addf %50, %49 : vector<16x1xf32>
    %c0_17 = arith.constant 0 : index
    %c0_18 = arith.constant 0 : index
    %52 = vector.load %arg5[%c0_17, %c0_18] : memref<16x1xf32, #tpu.memory_space<vmem>>, vector<16x1xf32>
    tpu.vector_store %arg5[%c0_17, %c0_18], %51 {strides = array<i32>} : memref<16x1xf32, #tpu.memory_space<vmem>>, vector<16x1xf32>,
    %c0_i32_19 = arith.constant 0 : i32
    %53 = arith.cmpi eq, %arg1, %c0_i32_19 : i32
    %54 = arith.extui %53 : i1 to i32
    %c0_i32_20 = arith.constant 0 : i32
    %55 = arith.cmpi ne, %54, %c0_i32_20 : i32
    scf.if %55 {
      %c0_21 = arith.constant 0 : index
      %c0_22 = arith.constant 0 : index
      %56 = vector.load %arg5[%c0_21, %c0_22] : memref<16x1xf32, #tpu.memory_space<vmem>>, vector<16x1xf32>
      %57 = vector.shape_cast %56 : vector<16x1xf32> to vector<1x16x1xf32>
      %cst_23 = arith.constant dense<0.000000e+00> : vector<1xf32>
      %58 = vector.multi_reduction <add>, %57, %cst_23 [1, 2] : vector<1x16x1xf32> to vector<1xf32>
      %59 = vector.shape_cast %58 : vector<1xf32> to vector<1x1x1xf32>
      %60 = vector.extract %59[0, 0, 0] : f32 from vector<1x1x1xf32>
      %cst_24 = arith.constant 0.173038244 : f32
      %61 = arith.mulf %cst_24, %60 : f32
      %62 = vector.broadcast %61 : f32 to vector<8x128xf32>
      %c0_25 = arith.constant 0 : index
      %c0_26 = arith.constant 0 : index
      %63 = vector.load %arg4[%c0_25, %c0_26] : memref<8x128xf32, #tpu.memory_space<vmem>>, vector<8x128xf32>
      tpu.vector_store %arg4[%c0_25, %c0_26], %62 {strides = array<i32>} : memref<8x128xf32, #tpu.memory_space<vmem>>, vector<8x128xf32>,
    } else {
    }
    return
  }
  func.func @transform_0(%arg0: i32, %arg1: i32) -> (i32, i32) {
    %c1_i32 = arith.constant 1 : i32
    %0 = arith.muli %arg0, %c1_i32 : i32
    %1 = arith.addi %0, %arg1 : i32
    %c0_i32 = arith.constant 0 : i32
    %c0_i32_0 = arith.constant 0 : i32
    return %1, %c0_i32 : i32, i32
  }
  func.func @transform_1(%arg0: i32, %arg1: i32) -> (i32, i32) {
    %c1_i32 = arith.constant 1 : i32
    %0 = arith.muli %arg0, %c1_i32 : i32
    %1 = arith.addi %0, %arg1 : i32
    %c0_i32 = arith.constant 0 : i32
    %c0_i32_0 = arith.constant 0 : i32
    return %1, %c0_i32 : i32, i32
  }
  func.func @transform_2(%arg0: i32, %arg1: i32) -> (i32, i32) {
    %c0_i32 = arith.constant 0 : i32
    %c0_i32_0 = arith.constant 0 : i32
    return %arg0, %c0_i32 : i32, i32
  }
}

</mosaic_0001>

<llo_original>
// kernel: tpu_custom_call.1
$region0: #{tpu_custom_call.1}
  #allocation0 [shape = 'u32[]', space=smem, size = 0x4, offset = 0x4, fixed_abs, tag = 'smem constant byte address 0x4 - core index']
  #allocation1 [shape = 'u32[144,128]{1,0:T(1,128)}', space=vmem, size = 0x12000, scoped, tag = 'internal scratch']
  #allocation2 [shape = 'f32[16,1]{1,0:T(8,128)}', space=vmem, size = 0x2000, scoped, tag = 'scratch operand']
  %s0 = inlined_call_operand.vmem [shape: f32[16,128], index: 0, kind: input, shape index: {}]
  %s1 = inlined_call_operand.vmem [shape: s32[16,1], index: 1, kind: input, shape index: {}]
  %s2 = inlined_call_operand.hbm [shape: f32[8,128], index: 2, kind: output, shape index: {}]
  %s3 = sld [smem:[#allocation0]]
  $region26: #{tpu_custom_call.1} parent=0
    _
  %s5 = ssub.s32 1, %s3
  %s6 = scalar_select 0, %s5, %s3
  $region1: #{tpu_custom_call.1} parent=0
    #allocation3 [shape = 'u8[4096]{0}', space=vmem, size = 0x1000, scoped, tag = 'output window, operand 0, single buffered']
    #allocation4 [shape = 's32[1]{0}', space=sflag, size = 0x4, scoped, tag = 'scoped memory for tpu_custom_call.1']
    %7 = vsyncpa [#allocation4], 0
    // Predicated region
    $region2: #{tpu_custom_call.1} parent=1 // pred_check
      _
    $region3: #{tpu_custom_call.1} parent=1 // pred_check_branch
      %9 = sbr.rel (0) target = $region5
    $region4: #{tpu_custom_call.1} parent=1 // pred_region
      %s10 = sadd.s32 0, 0
      %s11 = smul.u32 2, %s10
      %p12 = scmp.lt.s32.totalorder %s11, 1
      %s13 = scalar_select %p12, %s11, 1
      %s14 = smul.addr %s13, 8
      %s15 = scalar_lea.vmem %s0, %s14
      %s16 = sadd.s32 0, 0
      %s17 = smul.u32 2, %s16
    $region5: #{tpu_custom_call.1} parent=1 // pred_fallthru
      _
    // Predicated region
    $region6: #{tpu_custom_call.1} parent=1 // pred_check
      _
    $region7: #{tpu_custom_call.1} parent=1 // pred_check_branch
      %19 = sbr.rel (0) target = $region9
    $region8: #{tpu_custom_call.1} parent=1 // pred_region
      %s20 = sadd.s32 0, 0
      %s21 = smul.u32 2, %s20
      %p22 = scmp.lt.s32.totalorder %s21, 1
      %s23 = scalar_select %p22, %s21, 1
      %s24 = smul.addr %s23, 8
      %s25 = scalar_lea.vmem %s1, %s24
      %s26 = sadd.s32 0, 0
      %s27 = smul.u32 2, %s26
    $region9: #{tpu_custom_call.1} parent=1 // pred_fallthru
      _
    %s28 = sadd.s32 0, 0
    %s29 = smul.u32 2, %s28
    %p30 = scmp.lt.s32.totalorder %s29, 1
    %s31 = scalar_select %p30, %s29, 1
    %s32 = smul.addr %s31, 8
    %s33 = scalar_lea.vmem %s0, %s32
    %s34 = sadd.s32 0, 0
    %s35 = smul.u32 2, %s34
    %p36 = scmp.lt.s32.totalorder %s35, 1
    %s37 = scalar_select %p36, %s35, 1
    %s38 = smul.addr %s37, 8
    %s39 = scalar_lea.vmem %s1, %s38
    %s40 = sadd.s32 0, 0
    %s41 = smul.u32 2, %s40
    %p42 = scmp.lt.s32.totalorder %s41, 1
    %s43 = scalar_select %p42, %s41, 1
    %s44 = smul.addr %s43, 8
    %s45 = scalar_lea.vmem %s0, %s44
    %s46 = sadd.s32 0, 0
    %s47 = smul.u32 2, %s46
    %s48 = sadd.s32 0, 0
    %s49 = smul.u32 2, %s48
    %p50 = scmp.lt.s32.totalorder %s49, 1
    %s51 = scalar_select %p50, %s49, 1
    %s52 = smul.addr %s51, 8
    %s53 = scalar_lea.vmem %s1, %s52
    %s54 = sadd.s32 0, 0
    %s55 = smul.u32 2, %s54
    %p56 = scmp.eq.s32.totalorder 0, 0
    // Predicated region
    $region10: #{tpu_custom_call.1} parent=1 // pred_check
      %p57 = pneg %p56
    $region11: #{tpu_custom_call.1} parent=1 // pred_check_branch
      %59 = sbr.rel (%p57) target = $region13
    $region12: #{tpu_custom_call.1} parent=1 // pred_region
      %vm60 = vcmask 7168
      %61 = vst.msk [vmem:[#allocation2] sm:$0xff] %vm60, 0.0
      %62 = vst.msk [vmem:[#allocation2 + $0x8] sm:$0xff] %vm60, 0.0
    $region13: #{tpu_custom_call.1} parent=1 // pred_fallthru
      _
    %v63 = vld [vmem:[%s45] sm:$0xff]
    %v64 = vld [vmem:[%s45 + $0x8] sm:$0xff]
    %v65 = vld [vmem:[%s53] sm:$0xff]
    %v66 = vld [vmem:[%s53 + $0x8] sm:$0xff]
    %67 = vmax.xlane.f32.xlu0 %v63
    %v68 = vpop.xlane.xlu0 %67
    %69 = vmax.xlane.f32.xlu0 %v64
    %v70 = vpop.xlane.xlu0 %69
    %v71 = vsub.f32 %v63, %v68
    %v72 = vsub.f32 %v64, %v70
    %v73 = vmul.f32 %v71, 1.442695
    %v74 = vpow.pop %v73
    %v75 = vmul.f32 %v72, 1.442695
    %v76 = vpow.pop %v75
    %77 = vadd.xlane.f32.xlu0 %v74
    %v78 = vpop.xlane.xlu0 %77
    %79 = vadd.xlane.f32.xlu0 %v76
    %v80 = vpop.xlane.xlu0 %79
    %v81 = vlaneseq
    %v82 = vand.u32 %v81, 127
    %83 = vset.pattern.permute.xlu0 0
    %84 = vperm.xlu0 %83, %v65
    %v85 = vpop.permute.xlu0 %84
    %86 = vset.pattern.permute.xlu0 0
    %87 = vperm.xlu0 %86, %v66
    %v88 = vpop.permute.xlu0 %87
    %vm89 = vcmp.eq.s32.totalorder %v82, %v85
    %vm90 = vcmp.eq.s32.totalorder %v82, %v88
    %v91 = vsel %vm89, %v71, -inf
    %v92 = vsel %vm90, %v72, -inf
    %93 = vmax.xlane.f32.xlu0 %v91
    %v94 = vpop.xlane.xlu0 %93
    %95 = vmax.xlane.f32.xlu0 %v92
    %v96 = vpop.xlane.xlu0 %95
    %v97 = vmul.f32 %v94, 1.442695
    %v98 = vpow.pop %v97
    %v99 = vmul.f32 %v96, 1.442695
    %v100 = vpow.pop %v99
    %v101 = vrcp.pop %v78
    %v102 = vmul.f32 %v98, %v101
    %v103 = vrcp.pop %v80
    %v104 = vmul.f32 %v100, %v103
    %v105 = vlog2.pop %v78
    %v106 = vmul.f32 %v105, 0.6931472
    %v107 = vlog2.pop %v80
    %v108 = vmul.f32 %v107, 0.6931472
    %v109 = vsub.f32 %v94, %v106
    %v110 = vsub.f32 %v96, %v108
    %v111 = vmul.f32 %v102, 0.3
    %v112 = vmul.f32 %v104, 0.3
    %v113 = vadd.f32 %v111, 0.7
    %v114 = vadd.f32 %v112, 0.7
    %v115 = vlog2.pop %v113
    %v116 = vmul.f32 %v115, 0.6931472
    %v117 = vlog2.pop %v114
    %v118 = vmul.f32 %v117, 0.6931472
    %v119 = vmul.f32 %v116, -0.7
    %v120 = vmul.f32 %v118, -0.7
    %v121 = vsub.f32 1.0, %v102
    %v122 = vsub.f32 1.0, %v104
    %v123 = vmul.f32 %v121, 1.2039728
    %v124 = vmul.f32 %v122, 1.2039728
    %v125 = vsub.f32 %v109, %v116
    %v126 = vsub.f32 %v110, %v118
    %v127 = vmul.f32 %v102, %v125
    %v128 = vmul.f32 %v104, %v126
    %v129 = vadd.f32 %v123, %v127
    %v130 = vadd.f32 %v124, %v128
    %v131 = vmul.f32 %v129, 0.3
    %v132 = vmul.f32 %v130, 0.3
    %v133 = vadd.f32 %v119, %v131
    %v134 = vadd.f32 %v120, %v132
    %s135 = sadd.s32 0, 0
    %s136 = smul.u32 %s135, 16
    %v137 = vlaneseq
    %v138 = vshrl.u32 %v137, 7
    %v139 = vadd.s32 %v138, 8
    %v140 = vstv %s136
    %v141 = vadd.s32 %v140, %v138
    %v142 = vadd.s32 %v140, %v139
    %vm143 = vcmp.lt.s32.totalorder %v141, 16
    %vm144 = vcmp.lt.s32.totalorder %v142, 16
    %v145 = vsel %vm143, %v133, 0.0
    %v146 = vsel %vm144, %v134, 0.0
    %v147 = vld [vmem:[#allocation2] sm:$0xff]
    %v148 = vld [vmem:[#allocation2 + $0x8] sm:$0xff]
    %v149 = vadd.f32 %v147, %v145
    %v150 = vadd.f32 %v148, %v146
    %vm151 = vcmask 7168
    %152 = vst.msk [vmem:[#allocation2] sm:$0xff] %vm151, %v149
    %153 = vst.msk [vmem:[#allocation2 + $0x8] sm:$0xff] %vm151, %v150
    // Predicated region
    $region14: #{tpu_custom_call.1} parent=1 // pred_check
      %p154 = pneg %p56
    $region15: #{tpu_custom_call.1} parent=1 // pred_check_branch
      %156 = sbr.rel (%p154) target = $region17
    $region16: #{tpu_custom_call.1} parent=1 // pred_region
      %v157 = vld [vmem:[#allocation2] sm:$0xff]
      %v158 = vld [vmem:[#allocation2 + $0x8] sm:$0xff]
      %v159 = vsel %vm151, %v157, 0.0
      %v160 = vsel %vm151, %v158, 0.0
      %v161 = vadd.f32 %v159, %v160
      %162 = vadd.xlane.f32.xlu0 %v161
      %v163 = vpop.xlane.xlu0 %162
      %v164 = vrot.slane %v163, 4
      %v165 = vadd.f32 %v163, %v164
      %v166 = vrot.slane %v165, 2
      %v167 = vadd.f32 %v165, %v166
      %v168 = vrot.slane %v167, 1
      %v169 = vadd.f32 %v167, %v168
      %s170 = vtos %v169
      %s171 = smul.f32 %s170, 0.17303824
      %v172 = vstv %s171
      %173 = vst [vmem:[#allocation3] sm:$0xff] %v172
    $region17: #{tpu_custom_call.1} parent=1 // pred_fallthru
      _
    // Predicated region
    $region18: #{tpu_custom_call.1} parent=1 // pred_check
      _
    $region19: #{tpu_custom_call.1} parent=1 // pred_check_branch
      %175 = sbr.rel (0) target = $region21
    $region20: #{tpu_custom_call.1} parent=1 // pred_region
      %s177 = ssub.s32 128, 128
      %178 = vsyncadd [#allocation4], %s177
      %s180 = sshll.u32 [#allocation3], 4
      %s181 = int_to_ptr.vmem [resolvable:$true] %s180
      %183 = dma.vmem_to_hbm [thread:$0]  %s181, 128, %s2, [#allocation4]
    $region21: #{tpu_custom_call.1} parent=1 // pred_fallthru
      _
    // Predicated region
    $region22: #{tpu_custom_call.1} parent=1 // pred_check
      _
    $region23: #{tpu_custom_call.1} parent=1 // pred_check_branch
      %185 = sbr.rel (0) target = $region25
    $region24: #{tpu_custom_call.1} parent=1 // pred_region
      %186 = dma.done [#allocation4], 128
    $region25: #{tpu_custom_call.1} parent=1 // pred_fallthru
      _
    %187 = vsyncpa [#allocation4], 1

</llo_original>
